<compile_context>
chip_gen: v6e
topology: v6e:2x2x1
jax: 0.10.0
libtpu: 0.0.40
codegen_flags: <defaults>
</compile_context>

<pallas_src>
import jax
import jax.numpy as jnp
from jax.experimental import pallas as pl
from jax.experimental.pallas import tpu as pltpu

DEFAULT_EPSILON = 2e-20

_LANE = 128
_MAX_CLASS_TILE = 4096            # lane-dim class tile cap (vocab-sized C gets tiled)
_INPUT_VMEM_BUDGET = 8 * 1024 * 1024   # 2 inputs x 2 pipeline buffers stay under this


def _round_up(x: int, m: int) -> int:
    return ((x + m - 1) // m) * m


def _choose_tiles_lane_reduce(B: int, C: int, it_sum: int, row_mult: int):
    """dim == -1 layout: batch on sublanes, classes on lanes."""
    # Class tile: full extent when it fits (no padding, no mask, single class tile).
    TC = C if C <= _MAX_CLASS_TILE else _MAX_CLASS_TILE
    lanes_padded = _round_up(TC, _LANE)
    bytes_per_row = lanes_padded * it_sum
    max_tb = max(row_mult,
                 (_INPUT_VMEM_BUDGET // (2 * bytes_per_row)) // row_mult * row_mult)
    TB = min(_round_up(B, row_mult), 2048, max_tb)
    # v7x megacore: keep >= 2 batch tiles so the 'parallel' axis shards across both TCs.
    if B > row_mult:
        TB = min(TB, _round_up(pl.cdiv(B, 2), row_mult))
    return TB, TC


def _choose_tiles_sublane_reduce(B: int, C: int, it_sum: int, row_mult: int):
    """dim == 0 layout (array is (C, B)): classes on sublanes, batch on lanes."""
    TB = B if B <= _MAX_CLASS_TILE else _MAX_CLASS_TILE
    if B > _LANE:
        TB = min(TB, _round_up(pl.cdiv(B, 2), _LANE))   # >= 2 'parallel' batch tiles
    lanes_padded = _round_up(TB, _LANE)
    bytes_per_class_row = lanes_padded * it_sum
    max_tc = max(row_mult,
                 (_INPUT_VMEM_BUDGET // (2 * bytes_per_class_row)) // row_mult * row_mult)
    cap = min(2048, max_tc)
    TC = C if C <= cap else cap      # full extent when it fits -> fast path, no mask
    return TB, TC


def _make_nll_kernel(*, reduced: bool, log_input: bool, pred_clamp_min: float,
                     class_axis: int, B: int, C: int, TB: int, TC: int, nct: int):
    """Build the kernel body; static config is baked in via closure.

    class_axis: position of the reduced (class) axis inside each block.
      1 -> classes on lanes (dim == -1), 0 -> classes on sublanes (dim == 0).
    """
    batch_axis = 1 - class_axis
    blk_shape = (TB, TC) if class_axis == 1 else (TC, TB)
    mask_class = (C % TC != 0)                 # only the last class tile can be partial
    mask_batch = reduced and (B % TB != 0)     # padded rows must not pollute the sum

    def partial_sum(lp_ref, tgt_ref, c, apply_class_mask):
        lp = lp_ref[...].astype(jnp.float32)
        if not log_input:
            lp = jnp.log(jnp.maximum(lp, jnp.float32(pred_clamp_min)))
        prod = lp * tgt_ref[...].astype(jnp.float32)
        if apply_class_mask:
            cls = jax.lax.broadcasted_iota(jnp.int32, blk_shape, class_axis) + c * TC
            prod = jnp.where(cls < C, prod, 0.0)
        return jnp.sum(prod, axis=class_axis, keepdims=True)   # (TB,1) or (1,TB)

    def finalize(i, acc, out_ref):
        row = -acc                                              # per-row losses of tile i
        if reduced:
            if mask_batch:
                bidx = (jax.lax.broadcasted_iota(jnp.int32, row.shape, batch_axis)
                        + i * TB)
                row = jnp.where(bidx < B, row, 0.0)
            tile_sum = jnp.sum(row, axis=(0, 1), keepdims=True)          # (1, 1)
            # Lane-dense (1, 128) store; the wrapper reads column 0.
            out_ref[...] = jnp.broadcast_to(tile_sum, (1, _LANE))
        else:
            out_ref[...] = row

    if nct == 1:
        # Fast path: single class tile -> no accumulator scratch, no pl.when machinery.
        def kernel(lp_ref, tgt_ref, out_ref):
            i = pl.program_id(0)
            acc = partial_sum(lp_ref, tgt_ref, 0, mask_class)
            finalize(i, acc, out_ref)
        return kernel

    def kernel(lp_ref, tgt_ref, out_ref, acc_ref):
        i = pl.program_id(0)                     # batch tile  ("parallel")
        c = pl.program_id(1)                     # class tile  (reduction, "arbitrary")
        last_c = pl.num_programs(1) - 1

        @pl.when(c == 0)
        def _():
            acc_ref[...] = jnp.zeros_like(acc_ref)

        if mask_class:
            # Interior class tiles are always full -> mask only the last (partial) tile.
            @pl.when(c != last_c)
            def _():
                acc_ref[...] += partial_sum(lp_ref, tgt_ref, c, False)

            @pl.when(c == last_c)
            def _():
                acc_ref[...] += partial_sum(lp_ref, tgt_ref, c, True)
        else:
            acc_ref[...] += partial_sum(lp_ref, tgt_ref, c, False)

        @pl.when(c == last_c)
        def _():
            finalize(i, acc_ref[...], out_ref)

    return kernel


def nll_loss_vec_targets(logprobs, target, reduction: str = "mean", dim: int = -1,
                         log_input: bool = True, pred_clamp_min: float = DEFAULT_EPSILON,
                         block_b: int | None = None, block_c: int | None = None):
    if logprobs.shape != target.shape:
        raise ValueError(
            f"Invalid arguments shapes logprobs.shape={logprobs.shape!r} and "
            f"target.shape={target.shape!r}. (expected the same shape)")
    if not jnp.issubdtype(logprobs.dtype, jnp.floating):
        raise ValueError(f"Invalid argument type logprobs.dtype={logprobs.dtype!r}")
    if not jnp.issubdtype(target.dtype, jnp.floating):
        raise ValueError(f"Invalid argument type target.dtype={target.dtype!r}")
    if logprobs.ndim != 2:
        # Module contract is (batch_size, n_classes).
        # TODO(synk): support >2-D inputs by flattening the non-reduced axes in the wrapper.
        raise ValueError("This kernel supports 2-D (batch, n_classes) inputs.")
    if reduction not in ("mean", "sum", "none", "identity", "batchmean"):
        raise RuntimeError(
            f'Unknown reduction "{reduction}". Must be one of '
            f"{['mean', 'sum', 'none', 'batchmean']}.")
    reduced = reduction in ("mean", "sum", "batchmean")

    d = dim % logprobs.ndim
    class_axis = 1 if d == 1 else 0          # no jnp.moveaxis: swap the BlockSpec instead
    if class_axis == 1:
        B, C = logprobs.shape
    else:
        C, B = logprobs.shape

    it_lp = jnp.dtype(logprobs.dtype).itemsize
    it_tgt = jnp.dtype(target.dtype).itemsize
    it_sum = it_lp + it_tgt
    row_mult = max(8, 32 // min(it_lp, it_tgt))   # sublane mult: 8 f32, 16 bf16, 32 int8

    if class_axis == 1:
        TB, TC = _choose_tiles_lane_reduce(B, C, it_sum, row_mult)
    else:
        TB, TC = _choose_tiles_sublane_reduce(B, C, it_sum, row_mult)
    if block_b is not None:
        TB = int(block_b)
    if block_c is not None:
        TC = int(block_c)

    nbt = pl.cdiv(B, TB)
    nct = pl.cdiv(C, TC)

    kernel = _make_nll_kernel(reduced=reduced, log_input=bool(log_input),
                              pred_clamp_min=float(pred_clamp_min),
                              class_axis=class_axis, B=B, C=C, TB=TB, TC=TC, nct=nct)

    # ---- specs --------------------------------------------------------------------
    if class_axis == 1:
        in_block = (TB, TC)
        in_map = (lambda i: (i, 0)) if nct == 1 else (lambda i, c: (i, c))
    else:
        in_block = (TC, TB)
        in_map = (lambda i: (0, i)) if nct == 1 else (lambda i, c: (c, i))

    if reduced:
        # One lane-dense (1,128) partial-sum block per batch tile (no (B,1) store path).
        out_shape = jax.ShapeDtypeStruct((nbt, _LANE), jnp.float32)
        out_block = (1, _LANE)
        out_map = (lambda i: (i, 0)) if nct == 1 else (lambda i, c: (i, 0))
    else:
        if class_axis == 1:
            out_shape = jax.ShapeDtypeStruct((B, 1), jnp.float32)
            out_block = (TB, 1)
            out_map = (lambda i: (i, 0)) if nct == 1 else (lambda i, c: (i, 0))
        else:
            out_shape = jax.ShapeDtypeStruct((1, B), jnp.float32)   # lane-dense rows
            out_block = (1, TB)
            out_map = (lambda i: (0, i)) if nct == 1 else (lambda i, c: (0, i))

    if nct == 1:
        grid = (nbt,)
        scratch = []
        dims = ("parallel",)
    else:
        grid = (nbt, nct)                       # reduction (class) axis last
        acc_shape = (TB, 1) if class_axis == 1 else (1, TB)
        scratch = [pltpu.VMEM(acc_shape, jnp.float32)]
        dims = ("parallel", "arbitrary")

    cost = pl.CostEstimate(
        flops=2 * B * C,
        transcendentals=(B * C if not log_input else 0),
        bytes_accessed=B * C * it_sum + 4 * (nbt * _LANE if reduced else B))

    out = pl.pallas_call(
        kernel,
        out_shape=out_shape,
        grid_spec=pltpu.PrefetchScalarGridSpec(
            num_scalar_prefetch=0,
            grid=grid,
            in_specs=[pl.BlockSpec(in_block, in_map),
                      pl.BlockSpec(in_block, in_map)],
            out_specs=pl.BlockSpec(out_block, out_map),
            scratch_shapes=scratch),
        compiler_params=pltpu.CompilerParams(dimension_semantics=dims),
        cost_estimate=cost,
    )(logprobs, target)

    out_dtype = jnp.promote_types(logprobs.dtype, target.dtype)
    if reduced:
        total = jnp.sum(out[:, 0])              # tiny (nbt,) reduce done in XLA
        if reduction in ("mean", "batchmean"):  # loss vector is 1-D, so these coincide
            total = total / jnp.float32(B)
        return total.astype(out_dtype)
    return out.reshape(B).astype(out_dtype)


def _reference(logprobs, target, reduction="mean", dim=-1, log_input=True,
               pred_clamp_min=DEFAULT_EPSILON):
    lp = logprobs.astype(jnp.float32)
    tgt = target.astype(jnp.float32)
    if not log_input:
        lp = jnp.log(jnp.maximum(lp, pred_clamp_min))
    loss = -jnp.sum(lp * tgt, axis=dim)
    if reduction in ("mean", "batchmean"):
        return jnp.mean(loss)
    if reduction == "sum":
        return jnp.sum(loss)
    return loss


if __name__ == "__main__":
    key = jax.random.PRNGKey(0)
    k1, k2, k3, k4, k5, k6 = jax.random.split(key, 6)

    # ---- default module config on the canonical small shape ------------------------
    B, C = 8, 32
    logits = jax.random.normal(k1, (B, C), dtype=jnp.float32)
    logprobs = jax.nn.log_softmax(logits, axis=-1)
    target = jax.nn.softmax(jax.random.normal(k2, (B, C), dtype=jnp.float32), axis=-1)

    out = jax.block_until_ready(nll_loss_vec_targets(logprobs, target, reduction="mean"))
    ref = _reference(logprobs, target, reduction="mean")
    assert out.shape == ref.shape == ()
    assert jnp.allclose(out, ref, atol=1e-5, rtol=1e-5), (out, ref)

    # 'none' / 'batchmean' / 'sum' paths
    out_none = jax.block_until_ready(nll_loss_vec_targets(logprobs, target, reduction="none"))
    assert jnp.allclose(out_none, _reference(logprobs, target, reduction="none"),
                        atol=1e-5, rtol=1e-5)
    out_bm = jax.block_until_ready(
        nll_loss_vec_targets(logprobs, target, reduction="batchmean"))
    assert jnp.allclose(out_bm, _reference(logprobs, target, reduction="batchmean"),
                        atol=1e-5, rtol=1e-5)

    # log_input=False (probability inputs, clamp+log inside the kernel)
    probs = jnp.exp(logprobs)
    out_prob = jax.block_until_ready(
        nll_loss_vec_targets(probs, target, reduction="sum", log_input=False))
    ref_prob = _reference(probs, target, reduction="sum", log_input=False)
    assert jnp.allclose(out_prob, ref_prob, atol=1e-4, rtol=1e-5)

    # bf16 passthrough (inputs streamed in bf16, accumulated in f32 inside the kernel)
    lp_bf16 = logprobs.astype(jnp.bfloat16)
    tgt_bf16 = target.astype(jnp.bfloat16)
    out_bf16 = jax.block_until_ready(
        nll_loss_vec_targets(lp_bf16, tgt_bf16, reduction="mean"))
    ref_bf16 = _reference(lp_bf16, tgt_bf16, reduction="mean")
    assert jnp.allclose(out_bf16.astype(jnp.float32), ref_bf16, atol=2e-2, rtol=2e-2)

    # ---- multi-tile path with partial batch and class tiles (masking exercised) ----
    Bo, Co = 13, 300
    lp_o = jax.nn.log_softmax(jax.random.normal(k3, (Bo, Co), dtype=jnp.float32), axis=-1)
    tg_o = jax.nn.softmax(jax.random.normal(k4, (Bo, Co), dtype=jnp.float32), axis=-1)
    out_o = jax.block_until_ready(
        nll_loss_vec_targets(lp_o, tg_o, reduction="mean", block_b=8, block_c=128))
    assert jnp.allclose(out_o, _reference(lp_o, tg_o, reduction="mean"),
                        atol=1e-5, rtol=1e-5)
    out_o_none = jax.block_until_ready(
        nll_loss_vec_targets(lp_o, tg_o, reduction="none", block_b=8, block_c=128))
    assert out_o_none.shape == (Bo,)
    assert jnp.allclose(out_o_none, _reference(lp_o, tg_o, reduction="none"),
                        atol=1e-5, rtol=1e-5)
    # single-class-tile fast path on the same ragged shape (TC == C full extent)
    out_o_fast = jax.block_until_ready(nll_loss_vec_targets(lp_o, tg_o, reduction="mean"))
    assert jnp.allclose(out_o_fast, _reference(lp_o, tg_o, reduction="mean"),
                        atol=1e-5, rtol=1e-5)

    # ---- dim=0 path: reduction over the sublane axis, no moveaxis transpose --------
    Cd, Bd = 32, 8                                  # array layout is (classes, batch)
    lp_d = jax.nn.log_softmax(jax.random.normal(k5, (Cd, Bd), dtype=jnp.float32), axis=0)
    tg_d = jax.nn.softmax(jax.random.normal(k6, (Cd, Bd), dtype=jnp.float32), axis=0)
    out_d = jax.block_until_ready(nll_loss_vec_targets(lp_d, tg_d, reduction="mean", dim=0))
    assert jnp.allclose(out_d, _reference(lp_d, tg_d, reduction="mean", dim=0),
                        atol=1e-5, rtol=1e-5)
    out_d_none = jax.block_until_ready(
        nll_loss_vec_targets(lp_d, tg_d, reduction="none", dim=0))
    assert out_d_none.shape == (Bd,)
    assert jnp.allclose(out_d_none, _reference(lp_d, tg_d, reduction="none", dim=0),
                        atol=1e-5, rtol=1e-5)
    # dim=0 with a partial class tile on the sublane axis (mask path)
    out_d_tiled = jax.block_until_ready(
        nll_loss_vec_targets(lp_d[:20], tg_d[:20], reduction="sum", dim=0, block_c=8))
    assert jnp.allclose(out_d_tiled,
                        _reference(lp_d[:20], tg_d[:20], reduction="sum", dim=0),
                        atol=1e-5, rtol=1e-5)

    print("KERNEL_OK")
</pallas_src>

<mosaic_0001>
module attributes {stable_mosaic.version = 11 : i64} {
  func.func @kernel(%arg0: i32, %arg1: memref<8x32xf32, #tpu.memory_space<vmem>>, %arg2: memref<8x32xf32, #tpu.memory_space<vmem>>, %arg3: memref<1x128xf32, #tpu.memory_space<vmem>>) attributes {dimension_semantics = [#tpu.dimension_semantics<parallel>], iteration_bounds = array<i64: 1>, scalar_prefetch = 0 : i64, scratch_operands = 0 : i64, tpu.core_type = #tpu.core_type<tc>, window_params = [{transform_indices = @transform_0, window_bounds = array<i64: 8, 32>}, {transform_indices = @transform_1, window_bounds = array<i64: 8, 32>}, {transform_indices = @transform_2, window_bounds = array<i64: 1, 128>}]} {
    %c0 = arith.constant 0 : index
    %c0_0 = arith.constant 0 : index
    %0 = vector.load %arg1[%c0, %c0_0] : memref<8x32xf32, #tpu.memory_space<vmem>>, vector<8x32xf32>
    %c0_1 = arith.constant 0 : index
    %c0_2 = arith.constant 0 : index
    %1 = vector.load %arg2[%c0_1, %c0_2] : memref<8x32xf32, #tpu.memory_space<vmem>>, vector<8x32xf32>
    %2 = arith.mulf %0, %1 : vector<8x32xf32>
    %cst = arith.constant dense<0.000000e+00> : vector<8xf32>
    %3 = vector.multi_reduction <add>, %2, %cst [1] : vector<8x32xf32> to vector<8xf32>
    %4 = vector.shape_cast %3 : vector<8xf32> to vector<8x1xf32>
    %cst_3 = arith.constant 0.000000e+00 : f32
    %5 = vector.broadcast %cst_3 : f32 to vector<8x1xf32>
    %6 = arith.subf %5, %4 : vector<8x1xf32>
    %7 = vector.shape_cast %6 : vector<8x1xf32> to vector<1x8x1xf32>
    %cst_4 = arith.constant dense<0.000000e+00> : vector<1xf32>
    %8 = vector.multi_reduction <add>, %7, %cst_4 [1, 2] : vector<1x8x1xf32> to vector<1xf32>
    %9 = vector.shape_cast %8 : vector<1xf32> to vector<1x1x1xf32>
    %10 = vector.extract %9[0, 0, 0] : f32 from vector<1x1x1xf32>
    %11 = vector.broadcast %10 : f32 to vector<1x1xf32>
    %12 = vector.shape_cast %11 : vector<1x1xf32> to vector<1x1xf32>
    %13 = vector.broadcast %12 : vector<1x1xf32> to vector<1x128xf32>
    %c0_5 = arith.constant 0 : index
    %c0_6 = arith.constant 0 : index
    %14 = vector.load %arg3[%c0_5, %c0_6] : memref<1x128xf32, #tpu.memory_space<vmem>>, vector<1x128xf32>
    tpu.vector_store %arg3[%c0_5, %c0_6], %13 {strides = array<i32>} : memref<1x128xf32, #tpu.memory_space<vmem>>, vector<1x128xf32>,
    return
  }
  func.func @transform_0(%arg0: i32) -> (i32, i32) {
    %c0_i32 = arith.constant 0 : i32
    %c0_i32_0 = arith.constant 0 : i32
    return %arg0, %c0_i32 : i32, i32
  }
  func.func @transform_1(%arg0: i32) -> (i32, i32) {
    %c0_i32 = arith.constant 0 : i32
    %c0_i32_0 = arith.constant 0 : i32
    return %arg0, %c0_i32 : i32, i32
  }
  func.func @transform_2(%arg0: i32) -> (i32, i32) {
    %c0_i32 = arith.constant 0 : i32
    %c0_i32_0 = arith.constant 0 : i32
    return %arg0, %c0_i32 : i32, i32
  }
}

</mosaic_0001>

<llo_original>
// kernel: tpu_custom_call.1
$region0: #{tpu_custom_call.1}
  #allocation0 [shape = 'u32[]', space=smem, size = 0x4, offset = 0x4, fixed_abs, tag = 'smem constant byte address 0x4 - core index']
  #allocation1 [shape = 'u32[144,128]{1,0:T(1,128)}', space=vmem, size = 0x12000, scoped, tag = 'internal scratch']
  %s0 = inlined_call_operand.hbm [shape: f32[8,32], index: 0, kind: input, shape index: {}]
  %s1 = inlined_call_operand.hbm [shape: f32[8,32], index: 1, kind: input, shape index: {}]
  %s2 = inlined_call_operand.hbm [shape: f32[1,128], index: 2, kind: output, shape index: {}]
  %s3 = sld [smem:[#allocation0]]
  $region26: #{tpu_custom_call.1} parent=0
    _
  %s5 = ssub.s32 1, %s3
  %s6 = scalar_select 0, %s5, %s3
  $region1: #{tpu_custom_call.1} parent=0
    #allocation2 [shape = 'u8[4096]{0}', space=vmem, size = 0x1000, scoped, tag = 'input window, operand 0, single buffered']
    #allocation3 [shape = 's32[1]{0}', space=sflag, size = 0x4, scoped, tag = 'scoped memory for tpu_custom_call.1']
    #allocation4 [shape = 's32[1]{0}', space=sflag, size = 0x4, scoped, tag = 'scoped memory for tpu_custom_call.1']
    #allocation5 [shape = 'u8[4096]{0}', space=vmem, size = 0x1000, scoped, tag = 'input window, operand 1, single buffered']
    #allocation6 [shape = 's32[1]{0}', space=sflag, size = 0x4, scoped, tag = 'scoped memory for tpu_custom_call.1']
    #allocation7 [shape = 'u8[512]{0}', space=vmem, size = 0x400, scoped, tag = 'output window, operand 0, single buffered']
    %7 = vsyncpa [#allocation3], 0
    %8 = vsyncpa [#allocation6], 0
    %9 = vsyncpa [#allocation4], 0
    // Predicated region
    $region2: #{tpu_custom_call.1} parent=1 // pred_check
      _
    $region3: #{tpu_custom_call.1} parent=1 // pred_check_branch
      %11 = sbr.rel (0) target = $region5
    $region4: #{tpu_custom_call.1} parent=1 // pred_region
      %s13 = ssub.s32 128, 128
      %14 = vsyncadd [#allocation3], %s13
      %s16 = sshll.u32 [#allocation2], 4
      %s17 = int_to_ptr.vmem [resolvable:$true] %s16
      %19 = dma.hbm_to_vmem [thread:$0]  %s0, 128, %s17, [#allocation3]
    $region5: #{tpu_custom_call.1} parent=1 // pred_fallthru
      _
    // Predicated region
    $region6: #{tpu_custom_call.1} parent=1 // pred_check
      _
    $region7: #{tpu_custom_call.1} parent=1 // pred_check_branch
      %21 = sbr.rel (0) target = $region9
    $region8: #{tpu_custom_call.1} parent=1 // pred_region
      %s23 = ssub.s32 128, 128
      %24 = vsyncadd [#allocation6], %s23
      %s26 = sshll.u32 [#allocation5], 4
      %s27 = int_to_ptr.vmem [resolvable:$true] %s26
      %29 = dma.hbm_to_vmem [thread:$0]  %s1, 128, %s27, [#allocation6]
    $region9: #{tpu_custom_call.1} parent=1 // pred_fallthru
      _
    // Predicated region
    $region10: #{tpu_custom_call.1} parent=1 // pred_check
      _
    $region11: #{tpu_custom_call.1} parent=1 // pred_check_branch
      %31 = sbr.rel (0) target = $region13
    $region12: #{tpu_custom_call.1} parent=1 // pred_region
      %32 = dma.done [#allocation3], 128
    $region13: #{tpu_custom_call.1} parent=1 // pred_fallthru
      _
    // Predicated region
    $region14: #{tpu_custom_call.1} parent=1 // pred_check
      _
    $region15: #{tpu_custom_call.1} parent=1 // pred_check_branch
      %34 = sbr.rel (0) target = $region17
    $region16: #{tpu_custom_call.1} parent=1 // pred_region
      %35 = dma.done [#allocation6], 128
    $region17: #{tpu_custom_call.1} parent=1 // pred_fallthru
      _
    %v36 = vld [vmem:[#allocation2] sm:$0xff]
    %v37 = vld [vmem:[#allocation5] sm:$0xff]
    %v38 = vmul.f32 %v36, %v37
    %vm39 = vcmask 261120
    %v40 = vsel %vm39, %v38, 0.0
    %41 = vadd.xlane.f32.xlu0 %v40
    %v42 = vpop.xlane.xlu0 %41
    %v43 = vsub.f32 0.0, %v42
    %vm44 = vcmask 7168
    %v45 = vsel %vm44, %v43, 0.0
    %46 = vadd.xlane.f32.xlu0 %v45
    %v47 = vpop.xlane.xlu0 %46
    %v48 = vrot.slane %v47, 4
    %v49 = vadd.f32 %v47, %v48
    %v50 = vrot.slane %v49, 2
    %v51 = vadd.f32 %v49, %v50
    %v52 = vrot.slane %v51, 1
    %v53 = vadd.f32 %v51, %v52
    %s54 = vtos %v53
    %v55 = vstv %s54
    %56 = vst [vmem:[#allocation7] sm:$0x1] %v55
    // Predicated region
    $region18: #{tpu_custom_call.1} parent=1 // pred_check
      _
    $region19: #{tpu_custom_call.1} parent=1 // pred_check_branch
      %58 = sbr.rel (0) target = $region21
    $region20: #{tpu_custom_call.1} parent=1 // pred_region
      %s60 = ssub.s32 16, 16
      %61 = vsyncadd [#allocation4], %s60
      %s63 = sshll.u32 [#allocation7], 4
      %s64 = int_to_ptr.vmem [resolvable:$true] %s63
      %66 = dma.vmem_to_hbm [thread:$0]  %s64, 16, %s2, [#allocation4]
    $region21: #{tpu_custom_call.1} parent=1 // pred_fallthru
      _
    // Predicated region
    $region22: #{tpu_custom_call.1} parent=1 // pred_check
      _
    $region23: #{tpu_custom_call.1} parent=1 // pred_check_branch
      %68 = sbr.rel (0) target = $region25
    $region24: #{tpu_custom_call.1} parent=1 // pred_region
      %69 = dma.done [#allocation4], 16
    $region25: #{tpu_custom_call.1} parent=1 // pred_fallthru
      _
    %70 = vsyncpa [#allocation3], 1
    %71 = vsyncpa [#allocation6], 1
    %72 = vsyncpa [#allocation4], 1

</llo_original>
